<compile_context>
chip_gen: v5e
topology: v5e:2x2
jax: 0.10.0
libtpu: 0.0.40
codegen_flags: <defaults>
</compile_context>

<pallas_src>
import functools
import math

import jax
import jax.numpy as jnp
from jax.experimental import pallas as pl
from jax.experimental.pallas import tpu as pltpu


def _apply_activation(h, activation_id):
    """Mirror the PyTorch `activations` list: [ReLU, GELU, SiLU, new_gelu].

    `h` is the f32 MXU accumulation output; activation math stays in f32
    (also required on v5e where the VPU/EUP have no bf16 path)."""
    if activation_id == 0:           # nn.ReLU()
        return jnp.maximum(h, 0.0)
    elif activation_id == 1:         # nn.GELU() (exact / erf form)
        return 0.5 * h * (1.0 + jax.lax.erf(h * (1.0 / math.sqrt(2.0))))
    elif activation_id == 2:         # SiLU
        return h * jax.nn.sigmoid(h)
    elif activation_id == 3:         # new_gelu (tanh approximation)
        c = math.sqrt(2.0 / math.pi)
        return 0.5 * h * (1.0 + jnp.tanh(c * (h + 0.044715 * h * h * h)))
    else:
        raise ValueError(f"bad activation_id {activation_id}")


def ffn_kernel(x_ref, w1t_ref, w2t_ref, o_ref, acc_ref, *, activation_id):
    # x_ref:   (tm, E)      token tile
    # w1t_ref: (E, th)      chunk of W1.T  (pre-transposed in wrapper)
    # w2t_ref: (th, E)      chunk of W2.T  (pre-transposed in wrapper)
    # o_ref:   (tm, E)      output tile (resident across the hidden axis)
    # acc_ref: (tm, E) f32  accumulator scratch
    k = pl.program_id(1)

    @pl.when(k == 0)
    def _init():
        acc_ref[...] = jnp.zeros_like(acc_ref)

    x = x_ref[...]
    # partial hidden = x @ W1.T[:, chunk]   (MXU, f32 accumulation)
    h = jnp.dot(x, w1t_ref[...], preferred_element_type=jnp.float32)
    h = _apply_activation(h, activation_id)
    # accumulate act(hidden_chunk) @ W2.T[chunk, :]
    acc_ref[...] += jnp.dot(h.astype(x.dtype), w2t_ref[...],
                            preferred_element_type=jnp.float32)

    @pl.when(k == pl.num_programs(1) - 1)
    def _finalize():
        o_ref[...] = acc_ref[...].astype(o_ref.dtype)


def _round_up(a, b):
    return (a + b - 1) // b * b


def feed_forward(x, w1, w2, *, activation_id=0, dropout=0.0, training=False,
                 tm=256, th=512, compute_dtype=None):
    """x: (B, T, E).  w1: (4E, E), w2: (E, 4E) in PyTorch nn.Linear layout.

    tm: token-row tile (256 for v6e/v7x, use 128 on v5e).
    th: hidden-dim chunk (reduction axis).
    compute_dtype: e.g. jnp.bfloat16 to run the MXU in bf16 (f32 accumulate).
    """
    B, T, E = x.shape
    H = w1.shape[0]
    assert w1.shape == (H, E) and w2.shape == (E, H)
    if training and dropout > 0.0:
        # TODO(synk): training-mode dropout masking not implemented.
        raise NotImplementedError("training-mode dropout not supported")

    if compute_dtype is not None:
        x = x.astype(compute_dtype)
        w1 = w1.astype(compute_dtype)
        w2 = w2.astype(compute_dtype)

    # One-time HBM-side transposes so the kernel needs no per-step .T
    w1t = w1.T   # (E, H)
    w2t = w2.T   # (H, E)

    M = B * T
    x2d = x.reshape(M, E)

    # Row tile: keep it large, but never larger than (padded) M.
    tm_eff = min(tm, _round_up(M, 8))
    M_pad = _round_up(M, tm_eff)
    if M_pad != M:
        # Padded rows produce act(0)@W2 = 0 for all supported activations and
        # are sliced off afterwards; correctness is unaffected regardless.
        x2d = jnp.pad(x2d, ((0, M_pad - M), (0, 0)))

    # Hidden chunk: fall back to the full hidden dim if it does not divide.
    th_eff = th if (th <= H and H % th == 0) else H

    # Explicit VMEM budget (double-buffered tiles + f32 accumulator), capped
    # at 64 MiB so it is valid on v7x/v6e/v5e alike.
    itemsize = jnp.dtype(x2d.dtype).itemsize
    est = 2 * (tm_eff * E + E * th_eff + th_eff * E + tm_eff * E) * itemsize \
        + tm_eff * E * 4
    vmem_limit = int(min(max(4 * est, 32 * 1024 * 1024), 64 * 1024 * 1024))

    kernel = functools.partial(ffn_kernel, activation_id=activation_id)

    out2d = pl.pallas_call(
        kernel,
        out_shape=jax.ShapeDtypeStruct((M_pad, E), x2d.dtype),
        grid_spec=pltpu.PrefetchScalarGridSpec(
            num_scalar_prefetch=0,
            grid=(M_pad // tm_eff, H // th_eff),
            in_specs=[
                pl.BlockSpec((tm_eff, E), lambda i, k: (i, 0)),    # x tile
                pl.BlockSpec((E, th_eff), lambda i, k: (0, k)),    # W1.T chunk
                pl.BlockSpec((th_eff, E), lambda i, k: (k, 0)),    # W2.T chunk
            ],
            out_specs=pl.BlockSpec((tm_eff, E), lambda i, k: (i, 0)),
            scratch_shapes=[pltpu.VMEM((tm_eff, E), jnp.float32)],
        ),
        compiler_params=pltpu.CompilerParams(
            dimension_semantics=("parallel", "arbitrary"),
            vmem_limit_bytes=vmem_limit),
    )(x2d, w1t, w2t)

    if M_pad != M:
        out2d = out2d[:M]
    return out2d.reshape(B, T, E)


def _reference(x, w1, w2, activation_id):
    h = jnp.einsum("bte,he->bth", x, w1)
    h = _apply_activation(h, activation_id)
    return jnp.einsum("bth,eh->bte", h, w2)


if __name__ == "__main__":
    # Small shapes consistent with the module: batch=2, seq=8, n_embd=32.
    # (Real transformer E is 128-aligned; the lane dim here equals the full
    # array dim so the (8,128) tiling exception applies.)
    B, T, n_embd = 2, 8, 32
    hidden = 4 * n_embd

    key = jax.random.PRNGKey(0)
    kx, k1, k2 = jax.random.split(key, 3)

    x = jax.random.normal(kx, (B, T, n_embd), dtype=jnp.float32)

    # PyTorch nn.Linear default init: U(-1/sqrt(fan_in), 1/sqrt(fan_in))
    bound1 = 1.0 / math.sqrt(n_embd)
    bound2 = 1.0 / math.sqrt(hidden)
    w1 = jax.random.uniform(k1, (hidden, n_embd), jnp.float32, -bound1, bound1)
    w2 = jax.random.uniform(k2, (n_embd, hidden), jnp.float32, -bound2, bound2)

    for act_id in (0, 1, 2, 3):
        out = feed_forward(x, w1, w2, activation_id=act_id)
        out = jax.block_until_ready(out)
        ref = _reference(x, w1, w2, act_id)
        assert out.shape == (B, T, n_embd)
        assert jnp.allclose(out, ref, atol=1e-4, rtol=1e-4), \
            f"mismatch vs reference for activation_id={act_id}"

    print("KERNEL_OK")
</pallas_src>

<mosaic_0001>
module attributes {stable_mosaic.version = 11 : i64} {
  func.func @ffn_kernel(%arg0: i32, %arg1: i32, %arg2: memref<16x32xf32, #tpu.memory_space<vmem>>, %arg3: memref<32x128xf32, #tpu.memory_space<vmem>>, %arg4: memref<128x32xf32, #tpu.memory_space<vmem>>, %arg5: memref<16x32xf32, #tpu.memory_space<vmem>>, %arg6: memref<16x32xf32, #tpu.memory_space<vmem>>) attributes {dimension_semantics = [#tpu.dimension_semantics<parallel>, #tpu.dimension_semantics<arbitrary>], iteration_bounds = array<i64: 1, 1>, scalar_prefetch = 0 : i64, scratch_operands = 1 : i64, tpu.core_type = #tpu.core_type<tc>, window_params = [{transform_indices = @transform_0, window_bounds = array<i64: 16, 32>}, {transform_indices = @transform_1, window_bounds = array<i64: 32, 128>}, {transform_indices = @transform_2, window_bounds = array<i64: 128, 32>}, {transform_indices = @transform_3, window_bounds = array<i64: 16, 32>}]} {
    %c0_i32 = arith.constant 0 : i32
    %0 = arith.cmpi eq, %arg1, %c0_i32 : i32
    %1 = arith.extui %0 : i1 to i32
    %c0_i32_0 = arith.constant 0 : i32
    %2 = arith.cmpi ne, %1, %c0_i32_0 : i32
    scf.if %2 {
      %cst_14 = arith.constant 0.000000e+00 : f32
      %16 = vector.broadcast %cst_14 : f32 to vector<16x32xf32>
      %c0_15 = arith.constant 0 : index
      %c0_16 = arith.constant 0 : index
      %17 = vector.load %arg6[%c0_15, %c0_16] : memref<16x32xf32, #tpu.memory_space<vmem>>, vector<16x32xf32>
      tpu.vector_store %arg6[%c0_15, %c0_16], %16 {strides = array<i32>} : memref<16x32xf32, #tpu.memory_space<vmem>>, vector<16x32xf32>,
    } else {
    }
    %c0 = arith.constant 0 : index
    %c0_1 = arith.constant 0 : index
    %3 = vector.load %arg2[%c0, %c0_1] : memref<16x32xf32, #tpu.memory_space<vmem>>, vector<16x32xf32>
    %c0_2 = arith.constant 0 : index
    %c0_3 = arith.constant 0 : index
    %4 = vector.load %arg3[%c0_2, %c0_3] : memref<32x128xf32, #tpu.memory_space<vmem>>, vector<32x128xf32>
    %cst = arith.constant dense<0.000000e+00> : vector<16x128xf32>
    %5 = tpu.matmul %3, %4, %cst {dimension_numbers = #tpu.dot_dimension_numbers<[1], [0], [0], [1], [0, 0, 1, 1], [], []>} : vector<16x32xf32>, vector<32x128xf32>, vector<16x128xf32> -> vector<16x128xf32>
    %cst_4 = arith.constant 0.000000e+00 : f32
    %6 = vector.broadcast %cst_4 : f32 to vector<16x128xf32>
    %7 = arith.maximumf %5, %6 : vector<16x128xf32>
    %c0_5 = arith.constant 0 : index
    %c0_6 = arith.constant 0 : index
    %8 = vector.load %arg6[%c0_5, %c0_6] : memref<16x32xf32, #tpu.memory_space<vmem>>, vector<16x32xf32>
    %c0_7 = arith.constant 0 : index
    %c0_8 = arith.constant 0 : index
    %9 = vector.load %arg4[%c0_7, %c0_8] : memref<128x32xf32, #tpu.memory_space<vmem>>, vector<128x32xf32>
    %cst_9 = arith.constant dense<0.000000e+00> : vector<16x32xf32>
    %10 = tpu.matmul %7, %9, %cst_9 {dimension_numbers = #tpu.dot_dimension_numbers<[1], [0], [0], [1], [0, 0, 1, 1], [], []>} : vector<16x128xf32>, vector<128x32xf32>, vector<16x32xf32> -> vector<16x32xf32>
    %11 = arith.addf %8, %10 : vector<16x32xf32>
    %c0_10 = arith.constant 0 : index
    %c0_11 = arith.constant 0 : index
    %12 = vector.load %arg6[%c0_10, %c0_11] : memref<16x32xf32, #tpu.memory_space<vmem>>, vector<16x32xf32>
    tpu.vector_store %arg6[%c0_10, %c0_11], %11 {strides = array<i32>} : memref<16x32xf32, #tpu.memory_space<vmem>>, vector<16x32xf32>,
    %c0_i32_12 = arith.constant 0 : i32
    %13 = arith.cmpi eq, %arg1, %c0_i32_12 : i32
    %14 = arith.extui %13 : i1 to i32
    %c0_i32_13 = arith.constant 0 : i32
    %15 = arith.cmpi ne, %14, %c0_i32_13 : i32
    scf.if %15 {
      %c0_14 = arith.constant 0 : index
      %c0_15 = arith.constant 0 : index
      %16 = vector.load %arg6[%c0_14, %c0_15] : memref<16x32xf32, #tpu.memory_space<vmem>>, vector<16x32xf32>
      %c0_16 = arith.constant 0 : index
      %c0_17 = arith.constant 0 : index
      %17 = vector.load %arg5[%c0_16, %c0_17] : memref<16x32xf32, #tpu.memory_space<vmem>>, vector<16x32xf32>
      tpu.vector_store %arg5[%c0_16, %c0_17], %16 {strides = array<i32>} : memref<16x32xf32, #tpu.memory_space<vmem>>, vector<16x32xf32>,
    } else {
    }
    return
  }
  func.func @transform_0(%arg0: i32, %arg1: i32) -> (i32, i32) {
    %c0_i32 = arith.constant 0 : i32
    %c0_i32_0 = arith.constant 0 : i32
    return %arg0, %c0_i32 : i32, i32
  }
  func.func @transform_1(%arg0: i32, %arg1: i32) -> (i32, i32) {
    %c0_i32 = arith.constant 0 : i32
    %c0_i32_0 = arith.constant 0 : i32
    return %c0_i32, %arg1 : i32, i32
  }
  func.func @transform_2(%arg0: i32, %arg1: i32) -> (i32, i32) {
    %c0_i32 = arith.constant 0 : i32
    %c0_i32_0 = arith.constant 0 : i32
    return %arg1, %c0_i32 : i32, i32
  }
  func.func @transform_3(%arg0: i32, %arg1: i32) -> (i32, i32) {
    %c0_i32 = arith.constant 0 : i32
    %c0_i32_0 = arith.constant 0 : i32
    return %arg0, %c0_i32 : i32, i32
  }
}

</mosaic_0001>

<llo_original>
// kernel: tpu_custom_call.1
$region0: #{tpu_custom_call.1}
  #allocation0 [shape = 'u32[]', space=smem, size = 0x4, offset = 0x4, fixed_abs, tag = 'smem constant byte address 0x4 - core index']
  #allocation1 [shape = 'u32[72,128]{1,0:T(1,128)}', space=vmem, size = 0x9000, scoped, tag = 'internal scratch']
  #allocation2 [shape = 'f32[16,32]{1,0:T(8,128)}', space=vmem, size = 0x2000, scoped, tag = 'scratch operand']
  %s0 = inlined_call_operand.vmem [shape: f32[16,32], index: 0, kind: input, shape index: {}]
  %s1 = inlined_call_operand.vmem [shape: f32[32,128], index: 1, kind: input, shape index: {}]
  %s2 = inlined_call_operand.vmem [shape: f32[128,32], index: 2, kind: input, shape index: {}]
  %s3 = inlined_call_operand.hbm [shape: f32[16,32], index: 3, kind: output, shape index: {}]
  %s4 = sld [smem:[#allocation0]]
  $region30: #{tpu_custom_call.1} parent=0
    _
  %s6 = ssub.s32 1, %s4
  %s7 = scalar_select 0, %s6, %s4
  $region1: #{tpu_custom_call.1} parent=0
    #allocation3 [shape = 'u8[8192]{0}', space=vmem, size = 0x2000, scoped, tag = 'output window, operand 0, single buffered']
    #allocation4 [shape = 's32[1]{0}', space=sflag, size = 0x4, scoped, tag = 'scoped memory for tpu_custom_call.1']
    %8 = vsyncpa [#allocation4], 0
    // Predicated region
    $region2: #{tpu_custom_call.1} parent=1 // pred_check
      _
    $region3: #{tpu_custom_call.1} parent=1 // pred_check_branch
      %10 = sbr.rel (0) target = $region5
    $region4: #{tpu_custom_call.1} parent=1 // pred_region
      _
    $region5: #{tpu_custom_call.1} parent=1 // pred_fallthru
      _
    // Predicated region
    $region6: #{tpu_custom_call.1} parent=1 // pred_check
      _
    $region7: #{tpu_custom_call.1} parent=1 // pred_check_branch
      %12 = sbr.rel (0) target = $region9
    $region8: #{tpu_custom_call.1} parent=1 // pred_region
      _
    $region9: #{tpu_custom_call.1} parent=1 // pred_fallthru
      _
    // Predicated region
    $region10: #{tpu_custom_call.1} parent=1 // pred_check
      _
    $region11: #{tpu_custom_call.1} parent=1 // pred_check_branch
      %14 = sbr.rel (0) target = $region13
    $region12: #{tpu_custom_call.1} parent=1 // pred_region
      _
    $region13: #{tpu_custom_call.1} parent=1 // pred_fallthru
      _
    %p15 = scmp.eq.s32.totalorder 0, 0
    // Predicated region
    $region14: #{tpu_custom_call.1} parent=1 // pred_check
      %p16 = pneg %p15
    $region15: #{tpu_custom_call.1} parent=1 // pred_check_branch
      %18 = sbr.rel (%p16) target = $region17
    $region16: #{tpu_custom_call.1} parent=1 // pred_region
      %vm19 = vcmask 261120
      %20 = vst.msk [vmem:[#allocation2] sm:$0xff] %vm19, 0.0
      %21 = vst.msk [vmem:[#allocation2 + $0x8] sm:$0xff] %vm19, 0.0
    $region17: #{tpu_custom_call.1} parent=1 // pred_fallthru
      _
    %v22 = vld [vmem:[%s0] sm:$0xff]
    %v23 = vld [vmem:[%s0 + $0x8] sm:$0xff]
    %v24 = vld [vmem:[%s1] sm:$0xff]
    %v25 = vld [vmem:[%s1 + $0x8] sm:$0xff]
    %v26 = vld [vmem:[%s1 + $0x10] sm:$0xff]
    %v27 = vld [vmem:[%s1 + $0x18] sm:$0xff]
    %vm28 = vcmask 261120
    %v30 = vsel %vm28, %v22, 0
    %v33 = vsel %vm28, %v23, 0
    %35 = vmatpush.msra.mxu0 0.0
    %36 = vmatpush.msra.mxu0 0.0
    %37 = vmatpush.msra.mxu0 0.0
    %38 = vmatpush.msra.mxu0 0.0
    %39 = vmatpush.msra.mxu0 0.0
    %40 = vmatpush.msra.mxu0 0.0
    %41 = vmatpush.msra.mxu0 0.0
    %42 = vmatpush.msra.mxu0 0.0
    %43 = vmatpush.msra.mxu0 0.0
    %44 = vmatpush.msra.mxu0 0.0
    %45 = vmatpush.msra.mxu0 0.0
    %46 = vmatpush.msra.mxu0 0.0
    %47 = vmatpush.msra.mxu0 %v27
    %48 = vmatpush.msra.mxu0 %v26
    %49 = vmatpush.msra.mxu0 %v25
    %50 = vmatpush.msra.mxu0 %v24
    %51 = vmatmul.f32.gmra.mxu0 %v30
    %v52 = vpop.f32.mrf.mxu0
    %v53 = vadd.f32 0.0, %v52
    %54 = vmatmul.f32.gmra.mxu0 %v33
    %v55 = vpop.f32.mrf.mxu0
    %v56 = vadd.f32 0.0, %v55
    %57 = vdwg.mxu0
    %v58 = vmax.f32 %v53, 0.0
    %v59 = vmax.f32 %v56, 0.0
    %v60 = vld [vmem:[#allocation2] sm:$0xff]
    %v61 = vld [vmem:[#allocation2 + $0x8] sm:$0xff]
    %v62 = vld [vmem:[%s2] sm:$0xff]
    %v63 = vld [vmem:[%s2 + $0x8] sm:$0xff]
    %v64 = vld [vmem:[%s2 + $0x10] sm:$0xff]
    %v65 = vld [vmem:[%s2 + $0x18] sm:$0xff]
    %v66 = vld [vmem:[%s2 + $0x20] sm:$0xff]
    %v67 = vld [vmem:[%s2 + $0x28] sm:$0xff]
    %v68 = vld [vmem:[%s2 + $0x30] sm:$0xff]
    %v69 = vld [vmem:[%s2 + $0x38] sm:$0xff]
    %v70 = vld [vmem:[%s2 + $0x40] sm:$0xff]
    %v71 = vld [vmem:[%s2 + $0x48] sm:$0xff]
    %v72 = vld [vmem:[%s2 + $0x50] sm:$0xff]
    %v73 = vld [vmem:[%s2 + $0x58] sm:$0xff]
    %v74 = vld [vmem:[%s2 + $0x60] sm:$0xff]
    %v75 = vld [vmem:[%s2 + $0x68] sm:$0xff]
    %v76 = vld [vmem:[%s2 + $0x70] sm:$0xff]
    %v77 = vld [vmem:[%s2 + $0x78] sm:$0xff]
    %78 = vmatpush.msra.mxu0 %v77
    %79 = vmatpush.msra.mxu0 %v76
    %80 = vmatpush.msra.mxu0 %v75
    %81 = vmatpush.msra.mxu0 %v74
    %82 = vmatpush.msra.mxu0 %v73
    %83 = vmatpush.msra.mxu0 %v72
    %84 = vmatpush.msra.mxu0 %v71
    %85 = vmatpush.msra.mxu0 %v70
    %86 = vmatpush.msra.mxu0 %v69
    %87 = vmatpush.msra.mxu0 %v68
    %88 = vmatpush.msra.mxu0 %v67
    %89 = vmatpush.msra.mxu0 %v66
    %90 = vmatpush.msra.mxu0 %v65
    %91 = vmatpush.msra.mxu0 %v64
    %92 = vmatpush.msra.mxu0 %v63
    %93 = vmatpush.msra.mxu0 %v62
    %94 = vmatmul.f32.gmra.mxu0 %v58
    %v95 = vpop.f32.mrf.mxu0
    %v96 = vadd.f32 0.0, %v95
    %97 = vmatmul.f32.gmra.mxu0 %v59
    %v98 = vpop.f32.mrf.mxu0
    %v99 = vadd.f32 0.0, %v98
    %100 = vdwg.mxu0
    %v101 = vadd.f32 %v60, %v96
    %v102 = vadd.f32 %v61, %v99
    %103 = vst.msk [vmem:[#allocation2] sm:$0xff] %vm28, %v101
    %104 = vst.msk [vmem:[#allocation2 + $0x8] sm:$0xff] %vm28, %v102
    // Predicated region
    $region18: #{tpu_custom_call.1} parent=1 // pred_check
      %p105 = pneg %p15
    $region19: #{tpu_custom_call.1} parent=1 // pred_check_branch
      %107 = sbr.rel (%p105) target = $region21
    $region20: #{tpu_custom_call.1} parent=1 // pred_region
      %v108 = vld [vmem:[#allocation2] sm:$0xff]
      %v109 = vld [vmem:[#allocation2 + $0x8] sm:$0xff]
      %110 = vst.msk [vmem:[#allocation3] sm:$0xff] %vm28, %v108
      %111 = vst.msk [vmem:[#allocation3 + $0x8] sm:$0xff] %vm28, %v109
    $region21: #{tpu_custom_call.1} parent=1 // pred_fallthru
      _
    // Predicated region
    $region22: #{tpu_custom_call.1} parent=1 // pred_check
      _
    $region23: #{tpu_custom_call.1} parent=1 // pred_check_branch
      %113 = sbr.rel (0) target = $region25
    $region24: #{tpu_custom_call.1} parent=1 // pred_region
      %115 = vsyncadd [#allocation4], 0
      %s116 = sshll.u32 [#allocation3], 4
      %s117 = int_to_ptr.vmem [resolvable:$true] %s116
      %s118 = sshll.u32 %s3, 4
      %s119 = int_to_ptr.hbm [resolvable:$true] %s118
      %124 = dma.vmem_to_hbm [thread:$0]  %s117, 256, %s119, [#allocation4], 128, 128, 8
    $region25: #{tpu_custom_call.1} parent=1 // pred_fallthru
      _
    // Predicated region
    $region26: #{tpu_custom_call.1} parent=1 // pred_check
      _
    $region27: #{tpu_custom_call.1} parent=1 // pred_check_branch
      %126 = sbr.rel (0) target = $region29
    $region28: #{tpu_custom_call.1} parent=1 // pred_region
      %128 = dma.done [#allocation4], 256
    $region29: #{tpu_custom_call.1} parent=1 // pred_fallthru
      _
    %129 = vsyncpa [#allocation4], 1

</llo_original>
